<compile_context>
chip_gen: v7x
topology: tpu7x:2x2x1
jax: 0.10.0
libtpu: 0.0.40
codegen_flags: <defaults>
</compile_context>

<pallas_src>
import math

import jax
import jax.numpy as jnp
from jax.experimental import pallas as pl
from jax.experimental.pallas import tpu as pltpu


def _round_up(x, m):
    return ((x + m - 1) // m) * m


def _pick_batch_tile(batch, batch_tile):
    """Multiple-of-8 row tile; >= 2 grid steps for large batches (v7x 2 TCs)."""
    bt = min(batch_tile, _round_up(pl.cdiv(batch, 2), 256))
    # Never larger than the (8-row aligned) batch, so a tile's row range always
    # overlaps the array; the ragged tail block is masked by Pallas.
    bt = max(8, min(bt, (batch // 8) * 8))
    return bt


# ---------------------------------------------------------------------------
# Fused StyleTokenLayer kernel (one batch tile per grid step)
# ---------------------------------------------------------------------------
def _style_token_kernel(x_ref, a_ref, ab_ref, seg_ref, b_ref, bo_ref, out_ref):
    f32 = jnp.float32

    # Scores for all heads at once: query projection, per-head K^T and the
    # 1/sqrt(d_k) scale were pre-composed into a single (q_dim, H*T) matrix.
    x = x_ref[...].astype(jnp.bfloat16)                                  # MXU input
    s = jnp.dot(x, a_ref[...], preferred_element_type=f32) + ab_ref[...]  # (bt, H*T)

    # Per-head softmax with a shared per-row max (constant shift cancels in the
    # per-head normalisation, so one row-wide max suffices).
    m = jnp.max(s, axis=-1, keepdims=True)
    e = jnp.exp(s - m)                                                   # f32, EUP
    # Per-head sums broadcast back to every lane of the head via a tiny
    # (H*T, H*T) block-diagonal 0/1 matmul -- no lane shuffles or reshapes.
    denom = jnp.dot(e, seg_ref[...], preferred_element_type=f32)
    p = e * pl.reciprocal(denom, approx=True)                            # EUP divide

    # Attention-weighted values and the output projection were pre-composed
    # into one (H*T, n_feat) matrix; 256-wide lane-dense store.
    out = jnp.dot(p.astype(jnp.bfloat16), b_ref[...], preferred_element_type=f32)
    out_ref[...] = (out + bo_ref[...]).astype(out_ref.dtype)


# ---------------------------------------------------------------------------
# Wrapper
# ---------------------------------------------------------------------------
def style_token_layer(ref_embs, params, *, batch_tile=1024):
    """ref_embs: (B, ref_embed_dim) -> style embeddings (B, gst_token_dim)."""
    B, q_dim = ref_embs.shape
    gst_embs = params["gst_embs"]                   # (gst_tokens, gst_token_dim // heads)
    n_head = params["n_head"]
    n_feat = params["wq"].shape[0]
    d_k = n_feat // n_head
    T = gst_embs.shape[0]
    HT = n_head * T
    prec = jax.lax.Precision.HIGHEST
    f32 = jnp.float32

    # ---- parameter-only precomputation (tiny; hoisted out of the kernel) ----
    g = jnp.tanh(gst_embs.astype(f32))                                    # (T, d_k)
    k = jnp.dot(g, params["wk"].T, precision=prec) + params["bk"]         # (T, F)
    v = jnp.dot(g, params["wv"].T, precision=prec) + params["bv"]         # (T, F)

    # Block-diagonal K^T (F, H*T) and V (H*T, F): head h occupies block
    # [h*d_k:(h+1)*d_k] x [h*T:(h+1)*T], turning per-head attention into two
    # dense lane-aligned matmuls instead of 4x tiny sliced ones.
    kbd = jnp.zeros((n_feat, HT), f32)
    vbd = jnp.zeros((HT, n_feat), f32)
    for h in range(n_head):
        ks = k[:, h * d_k:(h + 1) * d_k]
        vs = v[:, h * d_k:(h + 1) * d_k]
        kbd = kbd.at[h * d_k:(h + 1) * d_k, h * T:(h + 1) * T].set(ks.T)
        vbd = vbd.at[h * T:(h + 1) * T, h * d_k:(h + 1) * d_k].set(vs)

    scale = 1.0 / math.sqrt(d_k)
    # Pre-compose the (linear) query projection with K^T (+ scale) and V with
    # the (linear) output projection.  bf16 for the MXU; biases stay f32.
    a_mat = (jnp.dot(params["wq"].T, kbd, precision=prec) * scale).astype(jnp.bfloat16)
    a_bias = (jnp.dot(params["bq"], kbd, precision=prec) * scale).reshape(1, HT)
    b_mat = jnp.dot(vbd, params["wo"].T, precision=prec).astype(jnp.bfloat16)
    b_bias = params["bo"].reshape(1, n_feat).astype(f32)

    head_id = jnp.arange(HT) // T
    seg = (head_id[:, None] == head_id[None, :]).astype(f32)              # (HT, HT)

    # ---- batch tiling: no full-array pad / slice; ragged tail is masked ----
    x_in = ref_embs
    b_eff = B
    if B < 8:                                       # degenerate tiny batch only
        x_in = jnp.pad(ref_embs, ((0, 8 - B), (0, 0)))
        b_eff = 8
    bt = _pick_batch_tile(b_eff, batch_tile)
    grid = (pl.cdiv(b_eff, bt),)

    out = pl.pallas_call(
        _style_token_kernel,
        out_shape=jax.ShapeDtypeStruct((b_eff, n_feat), f32),
        grid_spec=pltpu.PrefetchScalarGridSpec(
            num_scalar_prefetch=0,
            grid=grid,
            in_specs=[
                pl.BlockSpec((bt, q_dim), lambda i: (i, 0)),      # ref_embs tile
                pl.BlockSpec((q_dim, HT), lambda i: (0, 0)),      # fused Wq . K^T
                pl.BlockSpec((1, HT), lambda i: (0, 0)),          # fused score bias
                pl.BlockSpec((HT, HT), lambda i: (0, 0)),         # head-segment 0/1
                pl.BlockSpec((HT, n_feat), lambda i: (0, 0)),     # fused V . Wo^T
                pl.BlockSpec((1, n_feat), lambda i: (0, 0)),      # bo
            ],
            out_specs=pl.BlockSpec((bt, n_feat), lambda i: (i, 0)),
        ),
        compiler_params=pltpu.CompilerParams(
            dimension_semantics=("parallel",),
            vmem_limit_bytes=32 * 1024 * 1024,
        ),
    )(x_in, a_mat, a_bias, seg, b_mat, b_bias)

    return out[:B] if b_eff != B else out


# ---------------------------------------------------------------------------
# Parameters (torch-layout) and a pure-JAX reference for verification
# ---------------------------------------------------------------------------
def make_params(key, ref_embed_dim=128, gst_tokens=10, gst_token_dim=256,
                gst_heads=4):
    k_dim = gst_token_dim // gst_heads
    keys = jax.random.split(key, 5)

    def linear(k, fan_in, fan_out):
        bound = 1.0 / math.sqrt(fan_in)              # torch.nn.Linear default init
        kw, kb = jax.random.split(k)
        w = jax.random.uniform(kw, (fan_out, fan_in), jnp.float32, -bound, bound)
        b = jax.random.uniform(kb, (fan_out,), jnp.float32, -bound, bound)
        return w, b

    wq, bq = linear(keys[0], ref_embed_dim, gst_token_dim)
    wk, bk = linear(keys[1], k_dim, gst_token_dim)
    wv, bv = linear(keys[2], k_dim, gst_token_dim)
    wo, bo = linear(keys[3], gst_token_dim, gst_token_dim)
    gst_embs = jax.random.normal(keys[4], (gst_tokens, k_dim), jnp.float32)

    return dict(gst_embs=gst_embs, n_head=gst_heads,
                wq=wq, bq=bq, wk=wk, bk=bk, wv=wv, bv=bv, wo=wo, bo=bo)


def style_token_layer_ref(ref_embs, params):
    """Plain-JAX reference matching the PyTorch module semantics."""
    prec = jax.lax.Precision.HIGHEST
    gst = jnp.tanh(params["gst_embs"])
    q = jnp.dot(ref_embs, params["wq"].T, precision=prec) + params["bq"]   # (B, F)
    k = jnp.dot(gst, params["wk"].T, precision=prec) + params["bk"]        # (T, F)
    v = jnp.dot(gst, params["wv"].T, precision=prec) + params["bv"]        # (T, F)
    B, F = q.shape
    T = k.shape[0]
    H = params["n_head"]
    d_k = F // H
    qh = q.reshape(B, H, d_k)
    kh = k.reshape(T, H, d_k)
    vh = v.reshape(T, H, d_k)
    s = jnp.einsum("bhd,thd->bht", qh, kh, precision=prec) / math.sqrt(d_k)
    p = jax.nn.softmax(s, axis=-1)
    ctx = jnp.einsum("bht,thd->bhd", p, vh, precision=prec).reshape(B, F)
    return jnp.dot(ctx, params["wo"].T, precision=prec) + params["bo"]


if __name__ == "__main__":
    # Module defaults: ref_embed_dim=128, gst_tokens=10, gst_token_dim=256,
    # gst_heads=4; small batch B=2 as in the spec.
    key = jax.random.PRNGKey(0)
    pkey, xkey, xkey2 = jax.random.split(key, 3)
    params = make_params(pkey)

    ref_embs = jax.random.normal(xkey, (2, 128), jnp.float32)
    style_embs = jax.block_until_ready(style_token_layer(ref_embs, params))
    assert style_embs.shape == (2, 256) and style_embs.dtype == jnp.float32
    err = float(jnp.max(jnp.abs(style_embs - style_token_layer_ref(ref_embs, params))))
    # bf16 MXU inputs (accumulation / softmax in f32) -> ~1e-3 level error.
    assert err < 2e-2, f"max abs error vs reference (B=2): {err}"

    # A second small batch that exercises the multi-step grid + ragged tail.
    ref_embs2 = jax.random.normal(xkey2, (20, 128), jnp.float32)
    out2 = jax.block_until_ready(style_token_layer(ref_embs2, params))
    err2 = float(jnp.max(jnp.abs(out2 - style_token_layer_ref(ref_embs2, params))))
    assert out2.shape == (20, 256) and err2 < 2e-2, f"max abs error (B=20): {err2}"

    print("KERNEL_OK")
</pallas_src>

<mosaic_0001>
module attributes {stable_mosaic.version = 11 : i64} {
  func.func @_style_token_kernel(%arg0: i32, %arg1: memref<8x128xf32, #tpu.memory_space<vmem>>, %arg2: memref<128x40xbf16, #tpu.memory_space<vmem>>, %arg3: memref<1x40xf32, #tpu.memory_space<vmem>>, %arg4: memref<40x40xf32, #tpu.memory_space<vmem>>, %arg5: memref<40x256xbf16, #tpu.memory_space<vmem>>, %arg6: memref<1x256xf32, #tpu.memory_space<vmem>>, %arg7: memref<8x256xf32, #tpu.memory_space<vmem>>) attributes {dimension_semantics = [#tpu.dimension_semantics<parallel>], iteration_bounds = array<i64: 1>, scalar_prefetch = 0 : i64, scratch_operands = 0 : i64, tpu.core_type = #tpu.core_type<tc>, window_params = [{transform_indices = @transform_0, window_bounds = array<i64: 8, 128>}, {pipeline_mode = #tpu.pipeline_mode<synchronous>, transform_indices = @transform_1, window_bounds = array<i64: 128, 40>}, {pipeline_mode = #tpu.pipeline_mode<synchronous>, transform_indices = @transform_2, window_bounds = array<i64: 1, 40>}, {pipeline_mode = #tpu.pipeline_mode<synchronous>, transform_indices = @transform_3, window_bounds = array<i64: 40, 40>}, {pipeline_mode = #tpu.pipeline_mode<synchronous>, transform_indices = @transform_4, window_bounds = array<i64: 40, 256>}, {pipeline_mode = #tpu.pipeline_mode<synchronous>, transform_indices = @transform_5, window_bounds = array<i64: 1, 256>}, {transform_indices = @transform_6, window_bounds = array<i64: 8, 256>}]} {
    %c0 = arith.constant 0 : index
    %c0_0 = arith.constant 0 : index
    %0 = vector.load %arg1[%c0, %c0_0] : memref<8x128xf32, #tpu.memory_space<vmem>>, vector<8x128xf32>
    %1 = arith.truncf %0 : vector<8x128xf32> to vector<8x128xbf16>
    %c0_1 = arith.constant 0 : index
    %c0_2 = arith.constant 0 : index
    %2 = vector.load %arg2[%c0_1, %c0_2] : memref<128x40xbf16, #tpu.memory_space<vmem>>, vector<128x40xbf16>
    %cst = arith.constant dense<0.000000e+00> : vector<8x40xf32>
    %3 = tpu.matmul %1, %2, %cst {dimension_numbers = #tpu.dot_dimension_numbers<[1], [0], [0], [1], [0, 0, 1, 1], [], []>} : vector<8x128xbf16>, vector<128x40xbf16>, vector<8x40xf32> -> vector<8x40xf32>
    %c0_3 = arith.constant 0 : index
    %c0_4 = arith.constant 0 : index
    %4 = vector.load %arg3[%c0_3, %c0_4] : memref<1x40xf32, #tpu.memory_space<vmem>>, vector<1x40xf32>
    %5 = vector.broadcast %4 : vector<1x40xf32> to vector<8x40xf32>
    %6 = arith.addf %3, %5 : vector<8x40xf32>
    %cst_5 = arith.constant dense<0xFF800000> : vector<8xf32>
    %7 = vector.multi_reduction <maximumf>, %6, %cst_5 [1] : vector<8x40xf32> to vector<8xf32>
    %8 = vector.shape_cast %7 : vector<8xf32> to vector<8x1xf32>
    %9 = vector.broadcast %8 : vector<8x1xf32> to vector<8x40xf32>
    %10 = arith.subf %6, %9 : vector<8x40xf32>
    %11 = math.exp %10 : vector<8x40xf32>
    %c0_6 = arith.constant 0 : index
    %c0_7 = arith.constant 0 : index
    %12 = vector.load %arg4[%c0_6, %c0_7] : memref<40x40xf32, #tpu.memory_space<vmem>>, vector<40x40xf32>
    %cst_8 = arith.constant dense<0.000000e+00> : vector<8x40xf32>
    %13 = tpu.matmul %11, %12, %cst_8 {dimension_numbers = #tpu.dot_dimension_numbers<[1], [0], [0], [1], [0, 0, 1, 1], [], []>} : vector<8x40xf32>, vector<40x40xf32>, vector<8x40xf32> -> vector<8x40xf32>
    %14 = tpu.reciprocal %13 {approx = true} : vector<8x40xf32> -> vector<8x40xf32>
    %15 = arith.mulf %11, %14 : vector<8x40xf32>
    %16 = arith.truncf %15 : vector<8x40xf32> to vector<8x40xbf16>
    %c0_9 = arith.constant 0 : index
    %c0_10 = arith.constant 0 : index
    %17 = vector.load %arg5[%c0_9, %c0_10] : memref<40x256xbf16, #tpu.memory_space<vmem>>, vector<40x256xbf16>
    %cst_11 = arith.constant dense<0.000000e+00> : vector<8x256xf32>
    %18 = tpu.matmul %16, %17, %cst_11 {dimension_numbers = #tpu.dot_dimension_numbers<[1], [0], [0], [1], [0, 0, 1, 1], [], []>} : vector<8x40xbf16>, vector<40x256xbf16>, vector<8x256xf32> -> vector<8x256xf32>
    %c0_12 = arith.constant 0 : index
    %c0_13 = arith.constant 0 : index
    %19 = vector.load %arg6[%c0_12, %c0_13] : memref<1x256xf32, #tpu.memory_space<vmem>>, vector<1x256xf32>
    %20 = vector.broadcast %19 : vector<1x256xf32> to vector<8x256xf32>
    %21 = arith.addf %18, %20 : vector<8x256xf32>
    %c0_14 = arith.constant 0 : index
    %c0_15 = arith.constant 0 : index
    %22 = vector.load %arg7[%c0_14, %c0_15] : memref<8x256xf32, #tpu.memory_space<vmem>>, vector<8x256xf32>
    tpu.vector_store %arg7[%c0_14, %c0_15], %21 {strides = array<i32>} : memref<8x256xf32, #tpu.memory_space<vmem>>, vector<8x256xf32>,
    return
  }
  func.func @transform_0(%arg0: i32) -> (i32, i32) {
    %c0_i32 = arith.constant 0 : i32
    %c0_i32_0 = arith.constant 0 : i32
    return %arg0, %c0_i32 : i32, i32
  }
  func.func @transform_1(%arg0: i32) -> (i32, i32) {
    %c0_i32 = arith.constant 0 : i32
    %c0_i32_0 = arith.constant 0 : i32
    %c0_i32_1 = arith.constant 0 : i32
    return %c0_i32, %c0_i32_0 : i32, i32
  }
  func.func @transform_2(%arg0: i32) -> (i32, i32) {
    %c0_i32 = arith.constant 0 : i32
    %c0_i32_0 = arith.constant 0 : i32
    %c0_i32_1 = arith.constant 0 : i32
    return %c0_i32, %c0_i32_0 : i32, i32
  }
  func.func @transform_3(%arg0: i32) -> (i32, i32) {
    %c0_i32 = arith.constant 0 : i32
    %c0_i32_0 = arith.constant 0 : i32
    %c0_i32_1 = arith.constant 0 : i32
    return %c0_i32, %c0_i32_0 : i32, i32
  }
  func.func @transform_4(%arg0: i32) -> (i32, i32) {
    %c0_i32 = arith.constant 0 : i32
    %c0_i32_0 = arith.constant 0 : i32
    %c0_i32_1 = arith.constant 0 : i32
    return %c0_i32, %c0_i32_0 : i32, i32
  }
  func.func @transform_5(%arg0: i32) -> (i32, i32) {
    %c0_i32 = arith.constant 0 : i32
    %c0_i32_0 = arith.constant 0 : i32
    %c0_i32_1 = arith.constant 0 : i32
    return %c0_i32, %c0_i32_0 : i32, i32
  }
  func.func @transform_6(%arg0: i32) -> (i32, i32) {
    %c0_i32 = arith.constant 0 : i32
    %c0_i32_0 = arith.constant 0 : i32
    return %arg0, %c0_i32 : i32, i32
  }
}

</mosaic_0001>

<llo_original>
// kernel: tpu_custom_call.1
$region0: #{tpu_custom_call.1}
  #allocation0 [shape = 'u32[]', space=smem, size = 0x4, offset = 0x4, fixed_abs, tag = 'smem constant byte address 0x4 - core index']
  #allocation1 [shape = 'u32[144,128]{1,0:T(1,128)}', space=vmem, size = 0x12000, scoped, tag = 'internal scratch']
  %s0 = inlined_call_operand.hbm [shape: f32[8,128], index: 0, kind: input, shape index: {}]
  %s1 = inlined_call_operand.vmem [shape: bf16[128,40], index: 1, kind: input, shape index: {}]
  %s2 = inlined_call_operand.vmem [shape: f32[1,40], index: 2, kind: input, shape index: {}]
  %s3 = inlined_call_operand.vmem [shape: f32[40,40], index: 3, kind: input, shape index: {}]
  %s4 = inlined_call_operand.vmem [shape: bf16[40,256], index: 4, kind: input, shape index: {}]
  %s5 = inlined_call_operand.vmem [shape: f32[1,256], index: 5, kind: input, shape index: {}]
  %s6 = inlined_call_operand.hbm [shape: f32[8,256], index: 6, kind: output, shape index: {}]
  %s7 = sld [smem:[#allocation0]]
  $region38: #{tpu_custom_call.1} parent=0
    _
  %s9 = ssub.s32 1, %s7
  %s10 = scalar_select 0, %s9, %s7
  $region1: #{tpu_custom_call.1} parent=0
    #allocation2 [shape = 'u8[4096]{0}', space=vmem, size = 0x1000, scoped, tag = 'input window, operand 0, single buffered']
    #allocation3 [shape = 's32[1]{0}', space=sflag, size = 0x4, scoped, tag = 'scoped memory for tpu_custom_call.1']
    #allocation4 [shape = 's32[1]{0}', space=sflag, size = 0x4, scoped, tag = 'scoped memory for tpu_custom_call.1']
    #allocation5 [shape = 'u8[8192]{0}', space=vmem, size = 0x2000, scoped, tag = 'output window, operand 0, single buffered']
    %11 = vsyncpa [#allocation3], 0
    %12 = vsyncpa [#allocation4], 0
    // Predicated region
    $region2: #{tpu_custom_call.1} parent=1 // pred_check
      _
    $region3: #{tpu_custom_call.1} parent=1 // pred_check_branch
      %14 = sbr.rel (0) target = $region5
    $region4: #{tpu_custom_call.1} parent=1 // pred_region
      %s16 = ssub.s32 128, 128
      %17 = vsyncadd [#allocation3], %s16
      %s19 = sshll.u32 [#allocation2], 4
      %s20 = int_to_ptr.vmem [resolvable:$true] %s19
      %22 = dma.hbm_to_vmem [thread:$0]  %s0, 128, %s20, [#allocation3]
    $region5: #{tpu_custom_call.1} parent=1 // pred_fallthru
      _
    // Predicated region
    $region6: #{tpu_custom_call.1} parent=1 // pred_check
      _
    $region7: #{tpu_custom_call.1} parent=1 // pred_check_branch
      %24 = sbr.rel (0) target = $region9
    $region8: #{tpu_custom_call.1} parent=1 // pred_region
      _
    $region9: #{tpu_custom_call.1} parent=1 // pred_fallthru
      _
    // Predicated region
    $region10: #{tpu_custom_call.1} parent=1 // pred_check
      _
    $region11: #{tpu_custom_call.1} parent=1 // pred_check_branch
      %26 = sbr.rel (0) target = $region13
    $region12: #{tpu_custom_call.1} parent=1 // pred_region
      _
    $region13: #{tpu_custom_call.1} parent=1 // pred_fallthru
      _
    // Predicated region
    $region14: #{tpu_custom_call.1} parent=1 // pred_check
      _
    $region15: #{tpu_custom_call.1} parent=1 // pred_check_branch
      %28 = sbr.rel (0) target = $region17
    $region16: #{tpu_custom_call.1} parent=1 // pred_region
      _
    $region17: #{tpu_custom_call.1} parent=1 // pred_fallthru
      _
    // Predicated region
    $region18: #{tpu_custom_call.1} parent=1 // pred_check
      _
    $region19: #{tpu_custom_call.1} parent=1 // pred_check_branch
      %30 = sbr.rel (0) target = $region21
    $region20: #{tpu_custom_call.1} parent=1 // pred_region
      _
    $region21: #{tpu_custom_call.1} parent=1 // pred_fallthru
      _
    // Predicated region
    $region22: #{tpu_custom_call.1} parent=1 // pred_check
      _
    $region23: #{tpu_custom_call.1} parent=1 // pred_check_branch
      %32 = sbr.rel (0) target = $region25
    $region24: #{tpu_custom_call.1} parent=1 // pred_region
      _
    $region25: #{tpu_custom_call.1} parent=1 // pred_fallthru
      _
    // Predicated region
    $region26: #{tpu_custom_call.1} parent=1 // pred_check
      _
    $region27: #{tpu_custom_call.1} parent=1 // pred_check_branch
      %34 = sbr.rel (0) target = $region29
    $region28: #{tpu_custom_call.1} parent=1 // pred_region
      %35 = dma.done [#allocation3], 128
    $region29: #{tpu_custom_call.1} parent=1 // pred_fallthru
      _
    %v37 = vld [vmem:[#allocation2] sm:$0xff]
    %v38 = vpack.c.bf16 %v37, %v37
    %v39 = vld [vmem:[%s1] sm:$0xf]
    %v40 = vld [vmem:[%s1 + $0x4] sm:$0xf]
    %v41 = vld [vmem:[%s1 + $0x8] sm:$0xf]
    %v42 = vld [vmem:[%s1 + $0xc] sm:$0xf]
    %v43 = vld [vmem:[%s1 + $0x10] sm:$0xf]
    %v44 = vld [vmem:[%s1 + $0x14] sm:$0xf]
    %v45 = vld [vmem:[%s1 + $0x18] sm:$0xf]
    %v46 = vld [vmem:[%s1 + $0x1c] sm:$0xf]
    %v47 = vld [vmem:[%s1 + $0x20] sm:$0xf]
    %v48 = vld [vmem:[%s1 + $0x24] sm:$0xf]
    %v49 = vld [vmem:[%s1 + $0x28] sm:$0xf]
    %v50 = vld [vmem:[%s1 + $0x2c] sm:$0xf]
    %v51 = vld [vmem:[%s1 + $0x30] sm:$0xf]
    %v52 = vld [vmem:[%s1 + $0x34] sm:$0xf]
    %v53 = vld [vmem:[%s1 + $0x38] sm:$0xf]
    %v54 = vld [vmem:[%s1 + $0x3c] sm:$0xf]
    %v55 = vld [vmem:[%s2] sm:$0x1]
    %v57 = vlaneseq
    %v58 = vshrl.u32 %v57, 7
    %v59 = vsub.s32 0, %v58
    %v60 = vrot.slane %v55, %v59
    %v78 = vunpack.c.l.b16 %v39
    %v79 = vunpack.c.l.b16 %v40
    %v80 = vunpack.c.l.b16 %v41
    %v81 = vunpack.c.l.b16 %v42
    %v82 = vunpack.c.l.b16 %v43
    %v83 = vunpack.c.l.b16 %v44
    %v84 = vunpack.c.l.b16 %v45
    %v85 = vunpack.c.l.b16 %v46
    %v86 = vunpack.c.l.b16 %v47
    %v87 = vunpack.c.l.b16 %v48
    %v88 = vunpack.c.l.b16 %v49
    %v89 = vunpack.c.l.b16 %v50
    %v90 = vunpack.c.l.b16 %v51
    %v91 = vunpack.c.l.b16 %v52
    %v92 = vunpack.c.l.b16 %v53
    %v93 = vunpack.c.l.b16 %v54
    %v94 = vpack.c.b16 %v79, %v78
    %v95 = vpack.c.b16 %v81, %v80
    %v96 = vpack.c.b16 %v83, %v82
    %v97 = vpack.c.b16 %v85, %v84
    %v98 = vpack.c.b16 %v87, %v86
    %v99 = vpack.c.b16 %v89, %v88
    %v100 = vpack.c.b16 %v91, %v90
    %v101 = vpack.c.b16 %v93, %v92
    %110 = vmatprep.subr.bf16.mxu0 0
    %111 = vmatpush1.bf16.msra.mxu0 %v94
    %112 = vmatprep.subr.bf16.mxu0 0
    %113 = vmatpush1.bf16.msra.mxu0 %v95
    %114 = vmatprep.subr.bf16.mxu0 0
    %115 = vmatpush1.bf16.msra.mxu0 %v96
    %116 = vmatprep.subr.bf16.mxu0 0
    %117 = vmatpush1.bf16.msra.mxu0 %v97
    %118 = vmatprep.subr.bf16.mxu0 0
    %119 = vmatpush1.bf16.msra.mxu0 %v98
    %120 = vmatprep.subr.bf16.mxu0 0
    %121 = vmatpush1.bf16.msra.mxu0 %v99
    %122 = vmatprep.subr.bf16.mxu0 0
    %123 = vmatpush1.bf16.msra.mxu0 %v100
    %124 = vmatprep.subr.bf16.mxu0 0
    %125 = vmatpush1.bf16.msra.mxu0 %v101
    %126 = vmatprep.subr.bf16.mxu0 0
    %127 = vmatpush1.bf16.msra.mxu0 0
    %128 = vmatprep.subr.bf16.mxu0 0
    %129 = vmatpush1.bf16.msra.mxu0 0
    %130 = vmatprep.subr.bf16.mxu0 0
    %131 = vmatpush1.bf16.msra.mxu0 0
    %132 = vmatprep.subr.bf16.mxu0 0
    %133 = vmatpush1.bf16.msra.mxu0 0
    %134 = vmatprep.subr.bf16.mxu0 0
    %135 = vmatpush1.bf16.msra.mxu0 0
    %136 = vmatprep.subr.bf16.mxu0 0
    %137 = vmatpush1.bf16.msra.mxu0 0
    %138 = vmatprep.subr.bf16.mxu0 0
    %139 = vmatpush1.bf16.msra.mxu0 0
    %140 = vmatprep.subr.bf16.mxu0 0
    %141 = vmatpush1.bf16.msra.mxu0 0
    %142 = vmatprep.mubr.bf16.mxu0 0
    %143 = vmatmul.mubr.bf16.gmra.mrb[0].mxu0 %v38
    %v144 = vpop.f32.mrb[0].mxu0
    %v145 = vadd.f32 %v60, %v144
    %v146 = vpop.f32.mrb[0].mxu0
    %v147 = vpop.f32.mrb[0].mxu0
    %v148 = vpop.f32.mrb[0].mxu0
    %149 = vdwg.mxu0
    %vm150 = vcmask 326656
    %v151 = vsel %vm150, %v145, -inf
    %152 = vmax.xlane.f32.xlu0 %v151
    %v153 = vpop.xlane.xlu0 %152
    %v154 = vsub.f32 %v145, %v153
    %v155 = vmul.f32 %v154, 1.442695
    %v156 = vpow.pop %v155
    %v157 = vld [vmem:[%s3] sm:$0xff]
    %v158 = vld [vmem:[%s3 + $0x8] sm:$0xff]
    %v159 = vld [vmem:[%s3 + $0x10] sm:$0xff]
    %v160 = vld [vmem:[%s3 + $0x18] sm:$0xff]
    %v161 = vld [vmem:[%s3 + $0x20] sm:$0xff]
    %v163 = vsel %vm150, %v156, 0
    %165 = vmatprep.subr.mxu0 0.0
    %166 = vmatpush1.msra.mxu0 %v157
    %167 = vmatprep.subr.mxu0 0.0
    %168 = vmatpush1.msra.mxu0 %v158
    %169 = vmatprep.subr.mxu0 0.0
    %170 = vmatpush1.msra.mxu0 %v159
    %171 = vmatprep.subr.mxu0 0.0
    %172 = vmatpush1.msra.mxu0 %v160
    %173 = vmatprep.subr.mxu0 0.0
    %174 = vmatpush1.msra.mxu0 %v161
    %175 = vmatprep.subr.mxu0 0.0
    %176 = vmatpush1.msra.mxu0 0.0
    %177 = vmatprep.subr.mxu0 0.0
    %178 = vmatpush1.msra.mxu0 0.0
    %179 = vmatprep.subr.mxu0 0.0
    %180 = vmatpush1.msra.mxu0 0.0
    %181 = vmatprep.subr.mxu0 0.0
    %182 = vmatpush1.msra.mxu0 0.0
    %183 = vmatprep.subr.mxu0 0.0
    %184 = vmatpush1.msra.mxu0 0.0
    %185 = vmatprep.subr.mxu0 0.0
    %186 = vmatpush1.msra.mxu0 0.0
    %187 = vmatprep.subr.mxu0 0.0
    %188 = vmatpush1.msra.mxu0 0.0
    %189 = vmatprep.subr.mxu0 0.0
    %190 = vmatpush1.msra.mxu0 0.0
    %191 = vmatprep.subr.mxu0 0.0
    %192 = vmatpush1.msra.mxu0 0.0
    %193 = vmatprep.subr.mxu0 0.0
    %194 = vmatpush1.msra.mxu0 0.0
    %195 = vmatprep.subr.mxu0 0.0
    %196 = vmatpush1.msra.mxu0 0.0
    %197 = vmatprep.subr.mxu0 0.0
    %198 = vmatpush1.msra.mxu0 0.0
    %199 = vmatprep.subr.mxu0 0.0
    %200 = vmatpush1.msra.mxu0 0.0
    %201 = vmatprep.subr.mxu0 0.0
    %202 = vmatpush1.msra.mxu0 0.0
    %203 = vmatprep.subr.mxu0 0.0
    %204 = vmatpush1.msra.mxu0 0.0
    %205 = vmatprep.subr.mxu0 0.0
    %206 = vmatpush1.msra.mxu0 0.0
    %207 = vmatprep.subr.mxu0 0.0
    %208 = vmatpush1.msra.mxu0 0.0
    %209 = vmatprep.subr.mxu0 0.0
    %210 = vmatpush1.msra.mxu0 0.0
    %211 = vmatprep.subr.mxu0 0.0
    %212 = vmatpush1.msra.mxu0 0.0
    %213 = vmatprep.subr.mxu0 0.0
    %214 = vmatpush1.msra.mxu0 0.0
    %215 = vmatprep.subr.mxu0 0.0
    %216 = vmatpush1.msra.mxu0 0.0
    %217 = vmatprep.subr.mxu0 0.0
    %218 = vmatpush1.msra.mxu0 0.0
    %219 = vmatprep.subr.mxu0 0.0
    %220 = vmatpush1.msra.mxu0 0.0
    %221 = vmatprep.subr.mxu0 0.0
    %222 = vmatpush1.msra.mxu0 0.0
    %223 = vmatprep.subr.mxu0 0.0
    %224 = vmatpush1.msra.mxu0 0.0
    %225 = vmatprep.subr.mxu0 0.0
    %226 = vmatpush1.msra.mxu0 0.0
    %227 = vmatprep.subr.mxu0 0.0
    %228 = vmatpush1.msra.mxu0 0.0
    %229 = vmatprep.mubr.f32.mxu0 0.0
    %230 = vmatmul.mubr.f32.gmra.mrb[0].mxu0 %v163
    %v231 = vpop.f32.mrb[0].mxu0
    %v232 = vadd.f32 0.0, %v231
    %v233 = vpop.f32.mrb[0].mxu0
    %234 = vdwg.mxu0
    %v235 = vrcp.pop %v232
    %v236 = vmul.f32 %v156, %v235
    %v237 = vpack.c.bf16 %v236, %v236
    %v238 = vld [vmem:[%s4] sm:$0xff]
    %v239 = vld [vmem:[%s4 + $0x8] sm:$0xff]
    %v240 = vld [vmem:[%s4 + $0x10] sm:$0xff]
    %v241 = vld [vmem:[%s4 + $0x18] sm:$0xff]
    %v242 = vld [vmem:[%s4 + $0x20] sm:$0xff]
    %v243 = vld [vmem:[%s5] sm:$0x3]
    %v245 = vlaneseq
    %v246 = vshrl.u32 %v245, 7
    %v247 = vsub.s32 0, %v246
    %v248 = vrot.slane %v243, %v247
    %v249 = vlaneseq
    %v250 = vshrl.u32 %v249, 7
    %v251 = vsub.s32 1, %v250
    %v252 = vrot.slane %v243, %v251
    %v260 = vunpack.c.l.b16 %v238
    %v261 = vunpack.c.h.b16 %v238
    %v262 = vunpack.c.l.b16 %v239
    %v263 = vunpack.c.h.b16 %v239
    %v264 = vunpack.c.l.b16 %v240
    %v265 = vunpack.c.h.b16 %v240
    %v266 = vunpack.c.l.b16 %v241
    %v267 = vunpack.c.h.b16 %v241
    %v268 = vunpack.c.l.b16 %v242
    %v269 = vunpack.c.h.b16 %v242
    %v270 = vpack.c.b16 %v262, %v260
    %v271 = vpack.c.b16 %v263, %v261
    %v272 = vpack.c.b16 %v266, %v264
    %v273 = vpack.c.b16 %v267, %v265
    %v274 = vpack.c.b16 %v268, %v268
    %v275 = vpack.c.b16 %v269, %v269
    %v281 = vsel %vm150, %v237, 0
    %vm283 = vcmask 1043456
    %v285 = vsel %vm283, %v274, 0
    %v288 = vsel %vm283, %v275, 0
    %290 = vmatprep.subr.bf16.mxu0 %v271
    %291 = vmatpush1.bf16.msra.mxu0 %v270
    %292 = vmatprep.subr.bf16.mxu0 %v273
    %293 = vmatpush1.bf16.msra.mxu0 %v272
    %294 = vmatprep.subr.bf16.mxu0 %v288
    %295 = vmatpush1.bf16.msra.mxu0 %v285
    %296 = vmatprep.subr.bf16.mxu0 0
    %297 = vmatpush1.bf16.msra.mxu0 0
    %298 = vmatprep.subr.bf16.mxu0 0
    %299 = vmatpush1.bf16.msra.mxu0 0
    %300 = vmatprep.subr.bf16.mxu0 0
    %301 = vmatpush1.bf16.msra.mxu0 0
    %302 = vmatprep.subr.bf16.mxu0 0
    %303 = vmatpush1.bf16.msra.mxu0 0
    %304 = vmatprep.subr.bf16.mxu0 0
    %305 = vmatpush1.bf16.msra.mxu0 0
    %306 = vmatprep.subr.bf16.mxu0 0
    %307 = vmatpush1.bf16.msra.mxu0 0
    %308 = vmatprep.subr.bf16.mxu0 0
    %309 = vmatpush1.bf16.msra.mxu0 0
    %310 = vmatprep.subr.bf16.mxu0 0
    %311 = vmatpush1.bf16.msra.mxu0 0
    %312 = vmatprep.subr.bf16.mxu0 0
    %313 = vmatpush1.bf16.msra.mxu0 0
    %314 = vmatprep.subr.bf16.mxu0 0
    %315 = vmatpush1.bf16.msra.mxu0 0
    %316 = vmatprep.subr.bf16.mxu0 0
    %317 = vmatpush1.bf16.msra.mxu0 0
    %318 = vmatprep.subr.bf16.mxu0 0
    %319 = vmatpush1.bf16.msra.mxu0 0
    %320 = vmatprep.subr.bf16.mxu0 0
    %321 = vmatpush1.bf16.msra.mxu0 0
    %322 = vmatprep.mubr.bf16.mxu0 0
    %323 = vmatmul.mubr.bf16.gmra.mrb[0].mxu0 %v281
    %v324 = vpop.f32.mrb[0].mxu0
    %v325 = vadd.f32 %v248, %v324
    %v326 = vpop.f32.mrb[0].mxu0
    %v327 = vadd.f32 %v252, %v326
    %v328 = vpop.f32.mrb[0].mxu0
    %v329 = vpop.f32.mrb[0].mxu0
    %330 = vdwg.mxu0
    %331 = vst [vmem:[#allocation5] sm:$0xff] %v325
    %332 = vst [vmem:[#allocation5 + $0x8] sm:$0xff] %v327
    // Predicated region
    $region30: #{tpu_custom_call.1} parent=1 // pred_check
      _
    $region31: #{tpu_custom_call.1} parent=1 // pred_check_branch
      %334 = sbr.rel (0) target = $region33
    $region32: #{tpu_custom_call.1} parent=1 // pred_region
      %s336 = ssub.s32 256, 256
      %337 = vsyncadd [#allocation4], %s336
      %s339 = sshll.u32 [#allocation5], 4
      %s340 = int_to_ptr.vmem [resolvable:$true] %s339
      %342 = dma.vmem_to_hbm [thread:$0]  %s340, 256, %s6, [#allocation4]
    $region33: #{tpu_custom_call.1} parent=1 // pred_fallthru
      _
    // Predicated region
    $region34: #{tpu_custom_call.1} parent=1 // pred_check
      _
    $region35: #{tpu_custom_call.1} parent=1 // pred_check_branch
      %344 = sbr.rel (0) target = $region37
    $region36: #{tpu_custom_call.1} parent=1 // pred_region
      %345 = dma.done [#allocation4], 256
    $region37: #{tpu_custom_call.1} parent=1 // pred_fallthru
      _
    %346 = vsyncpa [#allocation3], 1
    %347 = vsyncpa [#allocation4], 1

</llo_original>
